<compile_context>
chip_gen: v6e
topology: v6e:2x2x1
jax: 0.10.0
libtpu: 0.0.40
codegen_flags: <defaults>
</compile_context>

<pallas_src>
import math

import jax
import jax.numpy as jnp
from jax import lax
from jax.experimental import pallas as pl
from jax.experimental.pallas import tpu as pltpu


def _round_up(x, m):
    return ((x + m - 1) // m) * m


def _pad_and_tile(dim, align, max_tile):
    """Return (padded_dim, tile) with tile | padded_dim and tile align-rounded."""
    max_tile = _round_up(max_tile, align)
    padded = _round_up(dim, align)
    if padded <= max_tile:
        return padded, padded
    return _round_up(dim, max_tile), max_tile


def _lora_kernel(x_ref, wt_ref, bias_ref, xa_ref, bt_ref, o_ref):
    ki = pl.program_id(2)

    # K-init: seed the resident output tile with bias + scaled LoRA update.
    # (xa is already scaled by alpha/r in the wrapper; lora dot is tiny.)
    @pl.when(ki == 0)
    def _():
        lora = lax.dot_general(
            xa_ref[...], bt_ref[...],
            dimension_numbers=(((1,), (0,)), ((), ())),
            preferred_element_type=jnp.float32)
        o_ref[...] = bias_ref[...] + lora

    # Base path: accumulate x(tm,tk) . W^T(tk,tn) directly into the f32 output
    # tile, which stays resident across the K axis (index_map ignores ki).
    o_ref[...] += lax.dot_general(
        x_ref[...], wt_ref[...],
        dimension_numbers=(((1,), (0,)), ((), ())),
        preferred_element_type=jnp.float32)


def prepare_lora_params(w, bias, a, b, *, r, alpha=None,
                        max_tn=512, max_tk=2048,
                        compute_dtype=jnp.bfloat16):
    """One-time preparation of the frozen / adapter parameters.

    w:    (N, K)  frozen base weight
    bias: (N,) or None
    a:    (r, K)  LoRA A
    b:    (N, r)  LoRA B
    Returns a dict of padded, pre-transposed, compute-dtype params + metadata.
    """
    alpha = float(alpha) if alpha is not None else float(r)
    scale = alpha / float(r)

    N, K = w.shape
    assert a.shape == (r, K) and b.shape == (N, r)
    if bias is None:
        bias = jnp.zeros((N,), jnp.float32)

    N_pad, tn = _pad_and_tile(N, 128, max_tn)
    K_pad, tk = _pad_and_tile(K, 128, max_tk)
    r_pad = _round_up(r, 8)          # sublane alignment only; no 128 blow-up

    cd = compute_dtype
    wt = jnp.pad(w.astype(cd).T, ((0, K_pad - K), (0, N_pad - N)))   # (K_pad, N_pad)
    at = jnp.pad(a.astype(cd).T, ((0, K_pad - K), (0, r_pad - r)))   # (K_pad, r_pad)
    bt = jnp.pad(b.astype(cd).T, ((0, r_pad - r), (0, N_pad - N)))   # (r_pad, N_pad)
    bias2d = jnp.pad(bias.astype(jnp.float32).reshape(1, N),
                     ((0, 0), (0, N_pad - N)))                        # (1, N_pad)

    return dict(wt=wt, at=at, bt=bt, bias2d=bias2d,
                N=N, K=K, N_pad=N_pad, K_pad=K_pad, tn=tn, tk=tk,
                r=r, r_pad=r_pad, scale=scale, compute_dtype=cd)


def lora_linear_forward(x, params, *, max_tm=512):
    """Fused LoRA linear forward: y = x @ W.T + bias + (alpha/r) * x @ A.T @ B.T."""
    M, K = x.shape
    assert K == params["K"]
    cd = params["compute_dtype"]
    N, N_pad, K_pad = params["N"], params["N_pad"], params["K_pad"]
    tn, tk, r_pad = params["tn"], params["tk"], params["r_pad"]

    M_pad, tm = _pad_and_tile(M, 8, max_tm)

    # Only x (and the x-dependent xa) are padded per call; frozen params were
    # padded/cast/transposed once in prepare_lora_params.
    xp = jnp.pad(x.astype(cd), ((0, M_pad - M), (0, K_pad - K)))      # (M_pad, K_pad)

    # LoRA first stage hoisted out of the kernel: xa = scale * (x @ A^T).
    xa = lax.dot_general(xp, params["at"],
                         dimension_numbers=(((1,), (0,)), ((), ())),
                         preferred_element_type=jnp.float32)
    xa = (xa * params["scale"]).astype(cd)                            # (M_pad, r_pad)

    grid = (M_pad // tm, N_pad // tn, K_pad // tk)

    # Per-generation VMEM budget (double-buffered tiles, f32 output tile).
    cd_bytes = jnp.dtype(cd).itemsize
    tile_bytes = (tm * tk * cd_bytes        # x
                  + tk * tn * cd_bytes      # W^T
                  + tn * 4                  # bias
                  + tm * r_pad * cd_bytes   # xa
                  + r_pad * tn * cd_bytes   # B^T
                  + tm * tn * 4)            # f32 output
    vmem_est = 2 * tile_bytes
    try:
        vmem_cap = int(pltpu.get_tpu_info().vmem_capacity_bytes)
    except Exception:
        vmem_cap = 64 * 2 ** 20           # conservative (v7x) fallback
    vmem_limit = int(min(max(2 * vmem_est, 16 * 2 ** 20), (vmem_cap * 3) // 4))

    out = pl.pallas_call(
        _lora_kernel,
        out_shape=jax.ShapeDtypeStruct((M_pad, N_pad), jnp.float32),
        grid_spec=pltpu.PrefetchScalarGridSpec(
            num_scalar_prefetch=0,
            grid=grid,
            in_specs=[
                pl.BlockSpec((tm, tk), lambda mi, ni, ki: (mi, ki)),     # x
                pl.BlockSpec((tk, tn), lambda mi, ni, ki: (ki, ni)),     # W^T
                pl.BlockSpec((1, tn), lambda mi, ni, ki: (0, ni)),       # bias
                pl.BlockSpec((tm, r_pad), lambda mi, ni, ki: (mi, 0)),   # xa (scaled)
                pl.BlockSpec((r_pad, tn), lambda mi, ni, ki: (0, ni)),   # B^T
            ],
            out_specs=pl.BlockSpec((tm, tn), lambda mi, ni, ki: (mi, ni)),
        ),
        compiler_params=pltpu.CompilerParams(
            # M and N fully independent -> both 'parallel' (v7x megacore);
            # K is the sequential reduction into the resident output tile.
            dimension_semantics=("parallel", "parallel", "arbitrary"),
            vmem_limit_bytes=vmem_limit,
        ),
    )(xp, params["wt"], params["bias2d"], xa, params["bt"])

    return out[:M, :N].astype(x.dtype)


if __name__ == "__main__":
    HP = lax.Precision.HIGHEST

    def ref(x, w, bias, a, b, scale):
        base = jnp.dot(x, w.T, precision=HP)
        lora = jnp.dot(jnp.dot(x, a.T, precision=HP), b.T, precision=HP)
        return base + bias + lora * scale

    def ref_cast(x, w, bias, a, b, scale, dt):
        """Reference following the kernel's mixed-precision cast points."""
        f32 = jnp.float32
        xc = x.astype(dt).astype(f32)
        wc = w.astype(dt).astype(f32)
        ac = a.astype(dt).astype(f32)
        bc = b.astype(dt).astype(f32)
        xa = (jnp.dot(xc, ac.T, precision=HP) * scale).astype(dt).astype(f32)
        return jnp.dot(xc, wc.T, precision=HP) + bias + jnp.dot(xa, bc.T, precision=HP)

    ok = True

    # --- Test 1: module-like small shapes (batch=8, in=32, out=32, r=4,
    #     alpha=8), f32 compute path for tight parity with the PyTorch module.
    batch, in_dim, out_dim, r, alpha = 8, 32, 32, 4, 8
    key = jax.random.PRNGKey(0)
    kx, kw, kb, ka, kb2 = jax.random.split(key, 5)
    x = jax.random.normal(kx, (batch, in_dim), dtype=jnp.float32)
    bound = 1.0 / math.sqrt(in_dim)
    w = jax.random.uniform(kw, (out_dim, in_dim), minval=-bound, maxval=bound,
                           dtype=jnp.float32)
    bias = jax.random.uniform(kb, (out_dim,), minval=-bound, maxval=bound,
                              dtype=jnp.float32)
    A = jax.random.normal(ka, (r, in_dim), dtype=jnp.float32) / math.sqrt(in_dim)
    B_zero = jnp.zeros((out_dim, r), dtype=jnp.float32)   # LoRA init: B = 0
    B_rand = jax.random.normal(kb2, (out_dim, r), dtype=jnp.float32) * 0.1

    for B in (B_zero, B_rand):
        params = prepare_lora_params(w, bias, A, B, r=r, alpha=alpha,
                                     compute_dtype=jnp.float32)
        y = jax.block_until_ready(lora_linear_forward(x, params))
        ok &= bool(jnp.allclose(y, ref(x, w, bias, A, B, alpha / r),
                                atol=1e-2, rtol=1e-2))

    # --- Test 2: non-aligned shapes exercising the full (M, N, K) grid with
    #     the default bf16 compute path, padding, and param reuse across calls.
    M2, K2, N2, r2, alpha2 = 200, 300, 192, 6, 12
    key2 = jax.random.PRNGKey(1)
    s1, s2, s3, s4, s5 = jax.random.split(key2, 5)
    x2 = jax.random.normal(s1, (M2, K2), dtype=jnp.float32)
    w2 = jax.random.normal(s2, (N2, K2), dtype=jnp.float32) / math.sqrt(K2)
    bias2 = jax.random.normal(s3, (N2,), dtype=jnp.float32) * 0.1
    A2 = jax.random.normal(s4, (r2, K2), dtype=jnp.float32) / math.sqrt(K2)
    B2 = jax.random.normal(s5, (N2, r2), dtype=jnp.float32) * 0.1
    scale2 = alpha2 / r2

    # Prepare once (frozen params padded/cast/transposed a single time)...
    params2 = prepare_lora_params(w2, bias2, A2, B2, r=r2, alpha=alpha2,
                                  max_tn=128, max_tk=128)   # force a real 3D grid
    # ...and reuse across multiple forward calls (only x is padded per call).
    for _ in range(2):
        y2 = jax.block_until_ready(lora_linear_forward(x2, params2, max_tm=64))

    ok &= bool(jnp.allclose(y2, ref_cast(x2, w2, bias2, A2, B2, scale2, jnp.bfloat16),
                            atol=1e-2, rtol=1e-2))
    ok &= bool(jnp.allclose(y2, ref(x2, w2, bias2, A2, B2, scale2),
                            atol=1e-1, rtol=1e-1))

    print("KERNEL_OK" if ok else "KERNEL_MISMATCH")
</pallas_src>

<mosaic_0001>
module attributes {stable_mosaic.version = 11 : i64} {
  func.func @_lora_kernel(%arg0: i32, %arg1: i32, %arg2: i32, %arg3: memref<8x128xf32, #tpu.memory_space<vmem>>, %arg4: memref<128x128xf32, #tpu.memory_space<vmem>>, %arg5: memref<1x128xf32, #tpu.memory_space<vmem>>, %arg6: memref<8x8xf32, #tpu.memory_space<vmem>>, %arg7: memref<8x128xf32, #tpu.memory_space<vmem>>, %arg8: memref<8x128xf32, #tpu.memory_space<vmem>>) attributes {dimension_semantics = [#tpu.dimension_semantics<parallel>, #tpu.dimension_semantics<parallel>, #tpu.dimension_semantics<arbitrary>], iteration_bounds = array<i64: 1, 1, 1>, scalar_prefetch = 0 : i64, scratch_operands = 0 : i64, tpu.core_type = #tpu.core_type<tc>, window_params = [{transform_indices = @transform_0, window_bounds = array<i64: 8, 128>}, {transform_indices = @transform_1, window_bounds = array<i64: 128, 128>}, {transform_indices = @transform_2, window_bounds = array<i64: 1, 128>}, {transform_indices = @transform_3, window_bounds = array<i64: 8, 8>}, {transform_indices = @transform_4, window_bounds = array<i64: 8, 128>}, {transform_indices = @transform_5, window_bounds = array<i64: 8, 128>}]} {
    %c0_i32 = arith.constant 0 : i32
    %0 = arith.cmpi eq, %arg2, %c0_i32 : i32
    %1 = arith.extui %0 : i1 to i32
    %c0_i32_0 = arith.constant 0 : i32
    %2 = arith.cmpi ne, %1, %c0_i32_0 : i32
    scf.if %2 {
      %c0_8 = arith.constant 0 : index
      %c0_9 = arith.constant 0 : index
      %9 = vector.load %arg6[%c0_8, %c0_9] : memref<8x8xf32, #tpu.memory_space<vmem>>, vector<8x8xf32>
      %c0_10 = arith.constant 0 : index
      %c0_11 = arith.constant 0 : index
      %10 = vector.load %arg7[%c0_10, %c0_11] : memref<8x128xf32, #tpu.memory_space<vmem>>, vector<8x128xf32>
      %cst_12 = arith.constant dense<0.000000e+00> : vector<8x128xf32>
      %11 = tpu.matmul %9, %10, %cst_12 {dimension_numbers = #tpu.dot_dimension_numbers<[1], [0], [0], [1], [0, 0, 1, 1], [], []>} : vector<8x8xf32>, vector<8x128xf32>, vector<8x128xf32> -> vector<8x128xf32>
      %c0_13 = arith.constant 0 : index
      %c0_14 = arith.constant 0 : index
      %12 = vector.load %arg5[%c0_13, %c0_14] : memref<1x128xf32, #tpu.memory_space<vmem>>, vector<1x128xf32>
      %13 = vector.broadcast %12 : vector<1x128xf32> to vector<8x128xf32>
      %14 = arith.addf %13, %11 : vector<8x128xf32>
      %c0_15 = arith.constant 0 : index
      %c0_16 = arith.constant 0 : index
      %15 = vector.load %arg8[%c0_15, %c0_16] : memref<8x128xf32, #tpu.memory_space<vmem>>, vector<8x128xf32>
      tpu.vector_store %arg8[%c0_15, %c0_16], %14 {strides = array<i32>} : memref<8x128xf32, #tpu.memory_space<vmem>>, vector<8x128xf32>,
    } else {
    }
    %c0 = arith.constant 0 : index
    %c0_1 = arith.constant 0 : index
    %3 = vector.load %arg8[%c0, %c0_1] : memref<8x128xf32, #tpu.memory_space<vmem>>, vector<8x128xf32>
    %c0_2 = arith.constant 0 : index
    %c0_3 = arith.constant 0 : index
    %4 = vector.load %arg3[%c0_2, %c0_3] : memref<8x128xf32, #tpu.memory_space<vmem>>, vector<8x128xf32>
    %c0_4 = arith.constant 0 : index
    %c0_5 = arith.constant 0 : index
    %5 = vector.load %arg4[%c0_4, %c0_5] : memref<128x128xf32, #tpu.memory_space<vmem>>, vector<128x128xf32>
    %cst = arith.constant dense<0.000000e+00> : vector<8x128xf32>
    %6 = tpu.matmul %4, %5, %cst {dimension_numbers = #tpu.dot_dimension_numbers<[1], [0], [0], [1], [0, 0, 1, 1], [], []>} : vector<8x128xf32>, vector<128x128xf32>, vector<8x128xf32> -> vector<8x128xf32>
    %7 = arith.addf %3, %6 : vector<8x128xf32>
    %c0_6 = arith.constant 0 : index
    %c0_7 = arith.constant 0 : index
    %8 = vector.load %arg8[%c0_6, %c0_7] : memref<8x128xf32, #tpu.memory_space<vmem>>, vector<8x128xf32>
    tpu.vector_store %arg8[%c0_6, %c0_7], %7 {strides = array<i32>} : memref<8x128xf32, #tpu.memory_space<vmem>>, vector<8x128xf32>,
    return
  }
  func.func @transform_0(%arg0: i32, %arg1: i32, %arg2: i32) -> (i32, i32) {
    %c0_i32 = arith.constant 0 : i32
    return %arg0, %arg2 : i32, i32
  }
  func.func @transform_1(%arg0: i32, %arg1: i32, %arg2: i32) -> (i32, i32) {
    %c0_i32 = arith.constant 0 : i32
    return %arg2, %arg1 : i32, i32
  }
  func.func @transform_2(%arg0: i32, %arg1: i32, %arg2: i32) -> (i32, i32) {
    %c0_i32 = arith.constant 0 : i32
    %c0_i32_0 = arith.constant 0 : i32
    return %c0_i32, %arg1 : i32, i32
  }
  func.func @transform_3(%arg0: i32, %arg1: i32, %arg2: i32) -> (i32, i32) {
    %c0_i32 = arith.constant 0 : i32
    %c0_i32_0 = arith.constant 0 : i32
    return %arg0, %c0_i32 : i32, i32
  }
  func.func @transform_4(%arg0: i32, %arg1: i32, %arg2: i32) -> (i32, i32) {
    %c0_i32 = arith.constant 0 : i32
    %c0_i32_0 = arith.constant 0 : i32
    return %c0_i32, %arg1 : i32, i32
  }
  func.func @transform_5(%arg0: i32, %arg1: i32, %arg2: i32) -> (i32, i32) {
    %c0_i32 = arith.constant 0 : i32
    return %arg0, %arg1 : i32, i32
  }
}

</mosaic_0001>

<llo_original>
// kernel: tpu_custom_call.1
$region0: #{tpu_custom_call.1}
  #allocation0 [shape = 'u32[]', space=smem, size = 0x4, offset = 0x4, fixed_abs, tag = 'smem constant byte address 0x4 - core index']
  #allocation1 [shape = 'u32[144,128]{1,0:T(1,128)}', space=vmem, size = 0x12000, scoped, tag = 'internal scratch']
  %s0 = inlined_call_operand.hbm [shape: f32[8,128], index: 0, kind: input, shape index: {}]
  %s1 = inlined_call_operand.hbm [shape: f32[128,128], index: 1, kind: input, shape index: {}]
  %s2 = inlined_call_operand.vmem [shape: f32[1,128], index: 2, kind: input, shape index: {}]
  %s3 = inlined_call_operand.hbm [shape: f32[8,8], index: 3, kind: input, shape index: {}]
  %s4 = inlined_call_operand.hbm [shape: f32[8,128], index: 4, kind: input, shape index: {}]
  %s5 = inlined_call_operand.hbm [shape: f32[8,128], index: 5, kind: output, shape index: {}]
  %s6 = sld [smem:[#allocation0]]
  $region50: #{tpu_custom_call.1} parent=0
    _
  %s8 = ssub.s32 1, %s6
  %s9 = scalar_select 0, %s8, %s6
  $region1: #{tpu_custom_call.1} parent=0
    #allocation2 [shape = 'u8[4096]{0}', space=vmem, size = 0x1000, scoped, tag = 'input window, operand 0, single buffered']
    #allocation3 [shape = 's32[1]{0}', space=sflag, size = 0x4, scoped, tag = 'scoped memory for tpu_custom_call.1']
    #allocation4 [shape = 's32[1]{0}', space=sflag, size = 0x4, scoped, tag = 'scoped memory for tpu_custom_call.1']
    #allocation5 [shape = 'u8[65536]{0}', space=vmem, size = 0x10000, scoped, tag = 'input window, operand 1, single buffered']
    #allocation6 [shape = 's32[1]{0}', space=sflag, size = 0x4, scoped, tag = 'scoped memory for tpu_custom_call.1']
    #allocation7 [shape = 'u8[4096]{0}', space=vmem, size = 0x1000, scoped, tag = 'input window, operand 3, single buffered']
    #allocation8 [shape = 'u8[4096]{0}', space=vmem, size = 0x1000, scoped, tag = 'input window, operand 4, single buffered']
    #allocation9 [shape = 's32[1]{0}', space=sflag, size = 0x4, scoped, tag = 'scoped memory for tpu_custom_call.1']
    #allocation10 [shape = 'u8[4096]{0}', space=vmem, size = 0x1000, scoped, tag = 'output window, operand 0, single buffered']
    %10 = vsyncpa [#allocation3], 0
    %11 = vsyncpa [#allocation6], 0
    %12 = vsyncpa [#allocation9], 0
    %13 = vsyncpa [#allocation4], 0
    // Predicated region
    $region2: #{tpu_custom_call.1} parent=1 // pred_check
      _
    $region3: #{tpu_custom_call.1} parent=1 // pred_check_branch
      %15 = sbr.rel (0) target = $region5
    $region4: #{tpu_custom_call.1} parent=1 // pred_region
      %s17 = ssub.s32 128, 128
      %18 = vsyncadd [#allocation3], %s17
      %s20 = sshll.u32 [#allocation2], 4
      %s21 = int_to_ptr.vmem [resolvable:$true] %s20
      %23 = dma.hbm_to_vmem [thread:$0]  %s0, 128, %s21, [#allocation3]
    $region5: #{tpu_custom_call.1} parent=1 // pred_fallthru
      _
    // Predicated region
    $region6: #{tpu_custom_call.1} parent=1 // pred_check
      _
    $region7: #{tpu_custom_call.1} parent=1 // pred_check_branch
      %25 = sbr.rel (0) target = $region9
    $region8: #{tpu_custom_call.1} parent=1 // pred_region
      %s27 = ssub.s32 2048, 2048
      %28 = vsyncadd [#allocation6], %s27
      %s29 = sshll.u32 [#allocation5], 4
      %s30 = int_to_ptr.vmem [resolvable:$true] %s29
      %35 = dma.hbm_to_vmem [thread:$0]  %s1, 2048, %s30, [#allocation6], 128, 128, 8
    $region9: #{tpu_custom_call.1} parent=1 // pred_fallthru
      _
    // Predicated region
    $region10: #{tpu_custom_call.1} parent=1 // pred_check
      _
    $region11: #{tpu_custom_call.1} parent=1 // pred_check_branch
      %37 = sbr.rel (0) target = $region13
    $region12: #{tpu_custom_call.1} parent=1 // pred_region
      _
    $region13: #{tpu_custom_call.1} parent=1 // pred_fallthru
      _
    // Predicated region
    $region14: #{tpu_custom_call.1} parent=1 // pred_check
      _
    $region15: #{tpu_custom_call.1} parent=1 // pred_check_branch
      %39 = sbr.rel (0) target = $region17
    $region16: #{tpu_custom_call.1} parent=1 // pred_region
      %s41 = ssub.s32 128, 128
      %42 = vsyncadd [#allocation6], %s41
      %s44 = sshll.u32 [#allocation7], 4
      %s45 = int_to_ptr.vmem [resolvable:$true] %s44
      %47 = dma.hbm_to_vmem [thread:$0]  %s3, 128, %s45, [#allocation6]
    $region17: #{tpu_custom_call.1} parent=1 // pred_fallthru
      _
    // Predicated region
    $region18: #{tpu_custom_call.1} parent=1 // pred_check
      _
    $region19: #{tpu_custom_call.1} parent=1 // pred_check_branch
      %49 = sbr.rel (0) target = $region21
    $region20: #{tpu_custom_call.1} parent=1 // pred_region
      %s51 = ssub.s32 128, 128
      %52 = vsyncadd [#allocation9], %s51
      %s54 = sshll.u32 [#allocation8], 4
      %s55 = int_to_ptr.vmem [resolvable:$true] %s54
      %57 = dma.hbm_to_vmem [thread:$0]  %s4, 128, %s55, [#allocation9]
    $region21: #{tpu_custom_call.1} parent=1 // pred_fallthru
      _
    // Predicated region
    $region22: #{tpu_custom_call.1} parent=1 // pred_check
      _
    $region23: #{tpu_custom_call.1} parent=1 // pred_check_branch
      %59 = sbr.rel (0) target = $region25
    $region24: #{tpu_custom_call.1} parent=1 // pred_region
      %60 = dma.done [#allocation3], 128
    $region25: #{tpu_custom_call.1} parent=1 // pred_fallthru
      _
    // Predicated region
    $region26: #{tpu_custom_call.1} parent=1 // pred_check
      _
    $region27: #{tpu_custom_call.1} parent=1 // pred_check_branch
      %62 = sbr.rel (0) target = $region29
    $region28: #{tpu_custom_call.1} parent=1 // pred_region
      %63 = dma.done [#allocation6], 2048
    $region29: #{tpu_custom_call.1} parent=1 // pred_fallthru
      _
    // Predicated region
    $region30: #{tpu_custom_call.1} parent=1 // pred_check
      _
    $region31: #{tpu_custom_call.1} parent=1 // pred_check_branch
      %65 = sbr.rel (0) target = $region33
    $region32: #{tpu_custom_call.1} parent=1 // pred_region
      %66 = dma.done [#allocation6], 128
    $region33: #{tpu_custom_call.1} parent=1 // pred_fallthru
      _
    // Predicated region
    $region34: #{tpu_custom_call.1} parent=1 // pred_check
      _
    $region35: #{tpu_custom_call.1} parent=1 // pred_check_branch
      %68 = sbr.rel (0) target = $region37
    $region36: #{tpu_custom_call.1} parent=1 // pred_region
      %69 = dma.done [#allocation9], 128
    $region37: #{tpu_custom_call.1} parent=1 // pred_fallthru
      _
    %p70 = scmp.eq.s32.totalorder 0, 0
    // Predicated region
    $region38: #{tpu_custom_call.1} parent=1 // pred_check
      %p71 = pneg %p70
    $region39: #{tpu_custom_call.1} parent=1 // pred_check_branch
      %73 = sbr.rel (%p71) target = $region41
    $region40: #{tpu_custom_call.1} parent=1 // pred_region
      %v74 = vld [vmem:[#allocation7] sm:$0xff]
      %v75 = vld [vmem:[#allocation8] sm:$0xff]
      %vm76 = vcmask 64512
      %v78 = vsel %vm76, %v74, 0
      %80 = vmatprep.subr.mxu0 0.0
      %81 = vmatpush1.msra.mxu0 0.0
      %82 = vmatprep.subr.mxu0 0.0
      %83 = vmatpush1.msra.mxu0 0.0
      %84 = vmatprep.subr.mxu0 0.0
      %85 = vmatpush1.msra.mxu0 0.0
      %86 = vmatprep.subr.mxu0 0.0
      %87 = vmatpush1.msra.mxu0 0.0
      %88 = vmatprep.subr.mxu0 0.0
      %89 = vmatpush1.msra.mxu0 0.0
      %90 = vmatprep.subr.mxu0 0.0
      %91 = vmatpush1.msra.mxu0 0.0
      %92 = vmatprep.subr.mxu0 0.0
      %93 = vmatpush1.msra.mxu0 0.0
      %94 = vmatprep.subr.mxu0 0.0
      %95 = vmatpush1.msra.mxu0 0.0
      %96 = vmatprep.subr.mxu0 0.0
      %97 = vmatpush1.msra.mxu0 0.0
      %98 = vmatprep.subr.mxu0 0.0
      %99 = vmatpush1.msra.mxu0 0.0
      %100 = vmatprep.subr.mxu0 0.0
      %101 = vmatpush1.msra.mxu0 0.0
      %102 = vmatprep.subr.mxu0 0.0
      %103 = vmatpush1.msra.mxu0 0.0
      %104 = vmatprep.subr.mxu0 0.0
      %105 = vmatpush1.msra.mxu0 0.0
      %106 = vmatprep.subr.mxu0 0.0
      %107 = vmatpush1.msra.mxu0 0.0
      %108 = vmatprep.subr.mxu0 0.0
      %109 = vmatpush1.msra.mxu0 0.0
      %110 = vmatprep.subr.mxu0 0.0
      %111 = vmatpush1.msra.mxu0 %v75
      %112 = vmatprep.subr.mxu0 0.0
      %113 = vmatpush2.msra.mxu0 0.0
      %114 = vmatprep.subr.mxu0 0.0
      %115 = vmatpush2.msra.mxu0 0.0
      %116 = vmatprep.subr.mxu0 0.0
      %117 = vmatpush2.msra.mxu0 0.0
      %118 = vmatprep.subr.mxu0 0.0
      %119 = vmatpush2.msra.mxu0 0.0
      %120 = vmatprep.subr.mxu0 0.0
      %121 = vmatpush2.msra.mxu0 0.0
      %122 = vmatprep.subr.mxu0 0.0
      %123 = vmatpush2.msra.mxu0 0.0
      %124 = vmatprep.subr.mxu0 0.0
      %125 = vmatpush2.msra.mxu0 0.0
      %126 = vmatprep.subr.mxu0 0.0
      %127 = vmatpush2.msra.mxu0 0.0
      %128 = vmatprep.subr.mxu0 0.0
      %129 = vmatpush2.msra.mxu0 0.0
      %130 = vmatprep.subr.mxu0 0.0
      %131 = vmatpush2.msra.mxu0 0.0
      %132 = vmatprep.subr.mxu0 0.0
      %133 = vmatpush2.msra.mxu0 0.0
      %134 = vmatprep.subr.mxu0 0.0
      %135 = vmatpush2.msra.mxu0 0.0
      %136 = vmatprep.subr.mxu0 0.0
      %137 = vmatpush2.msra.mxu0 0.0
      %138 = vmatprep.subr.mxu0 0.0
      %139 = vmatpush2.msra.mxu0 0.0
      %140 = vmatprep.subr.mxu0 0.0
      %141 = vmatpush2.msra.mxu0 0.0
      %142 = vmatprep.subr.mxu0 0.0
      %143 = vmatpush2.msra.mxu0 0.0
      %144 = vmatprep.mubr.f32.mxu0 0.0
      %145 = vmatmul.mubr.f32.gmra.mxu0 %v78
      %v146 = vpop.f32.mrf.mxu0
      %v147 = vadd.f32 0.0, %v146
      %v148 = vpop.f32.mrf.mxu0
      %149 = vdwg.mxu0
      %v150 = vld [vmem:[%s2] sm:$0x1]
      %v152 = vlaneseq
      %v153 = vshrl.u32 %v152, 7
      %v154 = vsub.s32 0, %v153
      %v155 = vrot.slane %v150, %v154
      %v157 = vadd.f32 %v155, %v147
      %158 = vst [vmem:[#allocation10] sm:$0xff] %v157
    $region41: #{tpu_custom_call.1} parent=1 // pred_fallthru
      _
    %v159 = vld [vmem:[#allocation10] sm:$0xff]
    %v160 = vld [vmem:[#allocation2] sm:$0xff]
    %v161 = vld [vmem:[#allocation5] sm:$0xff]
    %v162 = vld [vmem:[#allocation5 + $0x8] sm:$0xff]
    %v163 = vld [vmem:[#allocation5 + $0x10] sm:$0xff]
    %v164 = vld [vmem:[#allocation5 + $0x18] sm:$0xff]
    %v165 = vld [vmem:[#allocation5 + $0x20] sm:$0xff]
    %v166 = vld [vmem:[#allocation5 + $0x28] sm:$0xff]
    %v167 = vld [vmem:[#allocation5 + $0x30] sm:$0xff]
    %v168 = vld [vmem:[#allocation5 + $0x38] sm:$0xff]
    %v169 = vld [vmem:[#allocation5 + $0x40] sm:$0xff]
    %v170 = vld [vmem:[#allocation5 + $0x48] sm:$0xff]
    %v171 = vld [vmem:[#allocation5 + $0x50] sm:$0xff]
    %v172 = vld [vmem:[#allocation5 + $0x58] sm:$0xff]
    %v173 = vld [vmem:[#allocation5 + $0x60] sm:$0xff]
    %v174 = vld [vmem:[#allocation5 + $0x68] sm:$0xff]
    %v175 = vld [vmem:[#allocation5 + $0x70] sm:$0xff]
    %v176 = vld [vmem:[#allocation5 + $0x78] sm:$0xff]
    %177 = vmatprep.subr.mxu0 0.0
    %178 = vmatpush1.msra.mxu0 %v176
    %179 = vmatprep.subr.mxu0 0.0
    %180 = vmatpush1.msra.mxu0 %v175
    %181 = vmatprep.subr.mxu0 0.0
    %182 = vmatpush1.msra.mxu0 %v174
    %183 = vmatprep.subr.mxu0 0.0
    %184 = vmatpush1.msra.mxu0 %v173
    %185 = vmatprep.subr.mxu0 0.0
    %186 = vmatpush1.msra.mxu0 %v172
    %187 = vmatprep.subr.mxu0 0.0
    %188 = vmatpush1.msra.mxu0 %v171
    %189 = vmatprep.subr.mxu0 0.0
    %190 = vmatpush1.msra.mxu0 %v170
    %191 = vmatprep.subr.mxu0 0.0
    %192 = vmatpush1.msra.mxu0 %v169
    %193 = vmatprep.subr.mxu0 0.0
    %194 = vmatpush1.msra.mxu0 %v168
    %195 = vmatprep.subr.mxu0 0.0
    %196 = vmatpush1.msra.mxu0 %v167
    %197 = vmatprep.subr.mxu0 0.0
    %198 = vmatpush1.msra.mxu0 %v166
    %199 = vmatprep.subr.mxu0 0.0
    %200 = vmatpush1.msra.mxu0 %v165
    %201 = vmatprep.subr.mxu0 0.0
    %202 = vmatpush1.msra.mxu0 %v164
    %203 = vmatprep.subr.mxu0 0.0
    %204 = vmatpush1.msra.mxu0 %v163
    %205 = vmatprep.subr.mxu0 0.0
    %206 = vmatpush1.msra.mxu0 %v162
    %207 = vmatprep.subr.mxu0 0.0
    %208 = vmatpush1.msra.mxu0 %v161
    %209 = vmatprep.subr.mxu0 0.0
    %210 = vmatpush2.msra.mxu0 0.0
    %211 = vmatprep.subr.mxu0 0.0
    %212 = vmatpush2.msra.mxu0 0.0
    %213 = vmatprep.subr.mxu0 0.0
    %214 = vmatpush2.msra.mxu0 0.0
    %215 = vmatprep.subr.mxu0 0.0
    %216 = vmatpush2.msra.mxu0 0.0
    %217 = vmatprep.subr.mxu0 0.0
    %218 = vmatpush2.msra.mxu0 0.0
    %219 = vmatprep.subr.mxu0 0.0
    %220 = vmatpush2.msra.mxu0 0.0
    %221 = vmatprep.subr.mxu0 0.0
    %222 = vmatpush2.msra.mxu0 0.0
    %223 = vmatprep.subr.mxu0 0.0
    %224 = vmatpush2.msra.mxu0 0.0
    %225 = vmatprep.subr.mxu0 0.0
    %226 = vmatpush2.msra.mxu0 0.0
    %227 = vmatprep.subr.mxu0 0.0
    %228 = vmatpush2.msra.mxu0 0.0
    %229 = vmatprep.subr.mxu0 0.0
    %230 = vmatpush2.msra.mxu0 0.0
    %231 = vmatprep.subr.mxu0 0.0
    %232 = vmatpush2.msra.mxu0 0.0
    %233 = vmatprep.subr.mxu0 0.0
    %234 = vmatpush2.msra.mxu0 0.0
    %235 = vmatprep.subr.mxu0 0.0
    %236 = vmatpush2.msra.mxu0 0.0
    %237 = vmatprep.subr.mxu0 0.0
    %238 = vmatpush2.msra.mxu0 0.0
    %239 = vmatprep.subr.mxu0 0.0
    %240 = vmatpush2.msra.mxu0 0.0
    %241 = vmatprep.mubr.f32.mxu0 0.0
    %242 = vmatmul.mubr.f32.gmra.mxu0 %v160
    %v243 = vpop.f32.mrf.mxu0
    %v244 = vadd.f32 0.0, %v243
    %v245 = vpop.f32.mrf.mxu0
    %246 = vdwg.mxu0
    %v247 = vadd.f32 %v159, %v244
    %248 = vst [vmem:[#allocation10] sm:$0xff] %v247
    // Predicated region
    $region42: #{tpu_custom_call.1} parent=1 // pred_check
      _
    $region43: #{tpu_custom_call.1} parent=1 // pred_check_branch
      %250 = sbr.rel (0) target = $region45
    $region44: #{tpu_custom_call.1} parent=1 // pred_region
      %s252 = ssub.s32 128, 128
      %253 = vsyncadd [#allocation4], %s252
      %s255 = sshll.u32 [#allocation10], 4
      %s256 = int_to_ptr.vmem [resolvable:$true] %s255
      %258 = dma.vmem_to_hbm [thread:$0]  %s256, 128, %s5, [#allocation4]
    $region45: #{tpu_custom_call.1} parent=1 // pred_fallthru
      _
    // Predicated region
    $region46: #{tpu_custom_call.1} parent=1 // pred_check
      _
    $region47: #{tpu_custom_call.1} parent=1 // pred_check_branch
      %260 = sbr.rel (0) target = $region49
    $region48: #{tpu_custom_call.1} parent=1 // pred_region
      %261 = dma.done [#allocation4], 128
    $region49: #{tpu_custom_call.1} parent=1 // pred_fallthru
      _
    %262 = vsyncpa [#allocation3], 1
    %263 = vsyncpa [#allocation6], 1
    %264 = vsyncpa [#allocation9], 1
    %265 = vsyncpa [#allocation4], 1

</llo_original>
